<compile_context>
chip_gen: v7x
topology: tpu7x:2x2x1
jax: 0.10.0
libtpu: 0.0.40
codegen_flags: <defaults>
</compile_context>

<pallas_src>
import jax
import jax.numpy as jnp
from jax.experimental import pallas as pl
from jax.experimental.pallas import tpu as pltpu


def attention_linear_kernel(x_ref, att_ref, w_ref, b_ref, o_ref):
    # x_ref:   (bn, d_in)
    # att_ref: (bn, bo, d_in)
    # w_ref:   (bo, d_in)     -- the D_out slab for this grid column
    # b_ref:   (1, bo)
    # o_ref:   (bn, bo)
    #
    # Single fused expression (no named full-tile temporaries) so Mosaic can
    # feed the elementwise product straight into the cross-lane reduction
    # vreg-by-vreg instead of spilling whole-tile f32 intermediates once the
    # batch tile grows.
    out = jnp.sum(
        att_ref[...].astype(jnp.float32)
        * w_ref[...].astype(jnp.float32)[None, :, :]
        * x_ref[...].astype(jnp.float32)[:, None, :],
        axis=-1,
    )
    o_ref[...] = (out + b_ref[...].astype(jnp.float32)).astype(o_ref.dtype)


def _vmem_capacity_bytes():
    try:
        return int(pltpu.get_tpu_info().vmem_capacity_bytes)
    except Exception:  # interpret mode / older runtimes
        return 64 * 1024 * 1024  # conservative: v7x per-TensorCore VMEM


def _divisor_tile(dim, max_tile, align):
    """Largest multiple of `align` that divides `dim` and is <= max_tile.

    Falls back to the full dim (a full-extent block is always legal)."""
    if dim <= max_tile:
        return dim
    t = (max_tile // align) * align
    while t >= align:
        if dim % t == 0:
            return t
        t -= align
    return dim


def _choose_tiles(N, d_out, d_in, att_itemsize, vmem_cap):
    """Pick (bn, bo) so the double-buffered per-step footprint fits VMEM."""
    # Lane-dense output tile: multiple of 128 (or full D_out if small/odd).
    bo = _divisor_tile(d_out, 512, 128)

    # Use roughly half the physical VMEM for pipeline buffers, leaving the
    # rest for compiler scratch and the f32-widened compute.
    budget = vmem_cap // 2

    def step_bytes(bn):
        att = bn * bo * d_in * att_itemsize  # dominant term
        x = bn * d_in * 4
        w = bo * d_in * 4
        o = bn * bo * 4
        return 2 * (att + x + w + o)  # double-buffered

    # bn must be a multiple of 8 (sublane granularity of the 2-D x / out
    # blocks) or the full N.
    if N % 8 == 0:
        candidates = [t for t in range(N, 0, -8) if N % t == 0]
    else:
        candidates = [N]

    bn = candidates[-1]
    for cand in candidates:  # descending: biggest tile that fits wins
        if step_bytes(cand) <= budget:
            bn = cand
            break

    # Keep at least two grid steps when it is cheap to do so, so megacore
    # sharding (v7x has 2 TCs sharing HBM) has work to split.
    if (N // bn) * (d_out // bo) < 2 and bn % 16 == 0:
        bn //= 2

    return bn, bo


def attention_linear(x, attention, weight, bias, *, bn=None, bo=None,
                     vmem_limit_bytes=None):
    """x: [N, D_in], attention: [N, D_out, D_in], weight: [D_out, D_in],
    bias: [D_out].  Returns [N, D_out]."""
    N, d_in = x.shape
    d_out, d_in_w = weight.shape
    assert weight.shape[-2:] == attention.shape[-2:], (
        f"attention trailing dims {attention.shape[-2:]} must equal weight "
        f"shape {weight.shape[-2:]}")
    assert attention.shape[0] == N and d_in_w == d_in

    vmem_cap = _vmem_capacity_bytes()
    auto_bn, auto_bo = _choose_tiles(
        N, d_out, d_in, jnp.dtype(attention.dtype).itemsize, vmem_cap)
    bn = auto_bn if bn is None else bn
    bo = auto_bo if bo is None else bo
    assert N % bn == 0 and d_out % bo == 0

    if vmem_limit_bytes is None:
        # ~75% of physical VMEM: ~96 MiB on v5e/v6e, ~48 MiB on v7x.
        vmem_limit_bytes = int(vmem_cap * 0.75)

    bias2d = bias.reshape(1, d_out)

    # TODO(synk): for very large D_in, add a trailing "arbitrary" reduction
    # grid axis over D_in with an f32 VMEM accumulator (pl.when init/finalize).
    return pl.pallas_call(
        attention_linear_kernel,
        out_shape=jax.ShapeDtypeStruct((N, d_out), x.dtype),
        grid_spec=pltpu.PrefetchScalarGridSpec(
            num_scalar_prefetch=0,
            grid=(N // bn, d_out // bo),
            in_specs=[
                pl.BlockSpec((bn, d_in), lambda i, j: (i, 0)),
                pl.BlockSpec((bn, bo, d_in), lambda i, j: (i, j, 0)),
                pl.BlockSpec((bo, d_in), lambda i, j: (j, 0)),
                pl.BlockSpec((1, bo), lambda i, j: (0, j)),
            ],
            out_specs=pl.BlockSpec((bn, bo), lambda i, j: (i, j)),
        ),
        compiler_params=pltpu.CompilerParams(
            dimension_semantics=("parallel", "parallel"),
            vmem_limit_bytes=vmem_limit_bytes,
        ),
    )(x, attention, weight, bias2d)


def attention_linear_ref(x, attention, weight, bias):
    # Pure-JAX reference mirroring the PyTorch forward.
    w_mod = weight[None, :, :] * attention                 # [N, D_out, D_in]
    wx = jnp.einsum("ni,noi->no", x, w_mod)                # [N, D_out]
    return wx + bias


if __name__ == "__main__":
    N, D_IN, D_OUT = 16, 32, 16
    key = jax.random.PRNGKey(0)
    kx, ka, kw, kb = jax.random.split(key, 4)

    x = jax.random.normal(kx, (N, D_IN), dtype=jnp.float32)
    attention = jax.random.uniform(ka, (N, D_OUT, D_IN), dtype=jnp.float32)
    # Deterministic parameter init (Kaiming-uniform-ish, like nn.Linear).
    bound = 1.0 / (D_IN ** 0.5)
    weight = jax.random.uniform(kw, (D_OUT, D_IN), minval=-bound,
                                maxval=bound, dtype=jnp.float32)
    bias = jax.random.uniform(kb, (D_OUT,), minval=-bound, maxval=bound,
                              dtype=jnp.float32)

    out = jax.block_until_ready(attention_linear(x, attention, weight, bias))
    ref = attention_linear_ref(x, attention, weight, bias)

    assert out.shape == (N, D_OUT)
    assert jnp.allclose(out, ref, atol=1e-5, rtol=1e-5), "mismatch vs reference"
    print("KERNEL_OK")
</pallas_src>

<mosaic_0001>
module attributes {stable_mosaic.version = 11 : i64} {
  func.func @attention_linear_kernel(%arg0: i32, %arg1: i32, %arg2: memref<8x32xf32, #tpu.memory_space<vmem>>, %arg3: memref<8x16x32xf32, #tpu.memory_space<vmem>>, %arg4: memref<16x32xf32, #tpu.memory_space<vmem>>, %arg5: memref<1x16xf32, #tpu.memory_space<vmem>>, %arg6: memref<8x16xf32, #tpu.memory_space<vmem>>) attributes {dimension_semantics = [#tpu.dimension_semantics<parallel>, #tpu.dimension_semantics<parallel>], iteration_bounds = array<i64: 2, 1>, scalar_prefetch = 0 : i64, scratch_operands = 0 : i64, tpu.core_type = #tpu.core_type<tc>, window_params = [{transform_indices = @transform_0, window_bounds = array<i64: 8, 32>}, {transform_indices = @transform_1, window_bounds = array<i64: 8, 16, 32>}, {transform_indices = @transform_2, window_bounds = array<i64: 16, 32>}, {transform_indices = @transform_3, window_bounds = array<i64: 1, 16>}, {transform_indices = @transform_4, window_bounds = array<i64: 8, 16>}]} {
    %c0 = arith.constant 0 : index
    %c0_0 = arith.constant 0 : index
    %c0_1 = arith.constant 0 : index
    %0 = vector.load %arg3[%c0, %c0_0, %c0_1] : memref<8x16x32xf32, #tpu.memory_space<vmem>>, vector<8x16x32xf32>
    %c0_2 = arith.constant 0 : index
    %c0_3 = arith.constant 0 : index
    %1 = vector.load %arg4[%c0_2, %c0_3] : memref<16x32xf32, #tpu.memory_space<vmem>>, vector<16x32xf32>
    %2 = vector.shape_cast %1 : vector<16x32xf32> to vector<1x16x32xf32>
    %3 = vector.broadcast %2 : vector<1x16x32xf32> to vector<8x16x32xf32>
    %4 = arith.mulf %0, %3 : vector<8x16x32xf32>
    %c0_4 = arith.constant 0 : index
    %c0_5 = arith.constant 0 : index
    %5 = vector.load %arg2[%c0_4, %c0_5] : memref<8x32xf32, #tpu.memory_space<vmem>>, vector<8x32xf32>
    %6 = vector.shape_cast %5 : vector<8x32xf32> to vector<8x1x32xf32>
    %7 = vector.broadcast %6 : vector<8x1x32xf32> to vector<8x16x32xf32>
    %8 = arith.mulf %4, %7 : vector<8x16x32xf32>
    %cst = arith.constant dense<0.000000e+00> : vector<8x16xf32>
    %9 = vector.multi_reduction <add>, %8, %cst [2] : vector<8x16x32xf32> to vector<8x16xf32>
    %c0_6 = arith.constant 0 : index
    %c0_7 = arith.constant 0 : index
    %10 = vector.load %arg5[%c0_6, %c0_7] : memref<1x16xf32, #tpu.memory_space<vmem>>, vector<1x16xf32>
    %11 = vector.broadcast %10 : vector<1x16xf32> to vector<8x16xf32>
    %12 = arith.addf %9, %11 : vector<8x16xf32>
    %c0_8 = arith.constant 0 : index
    %c0_9 = arith.constant 0 : index
    %13 = vector.load %arg6[%c0_8, %c0_9] : memref<8x16xf32, #tpu.memory_space<vmem>>, vector<8x16xf32>
    tpu.vector_store %arg6[%c0_8, %c0_9], %12 {strides = array<i32>} : memref<8x16xf32, #tpu.memory_space<vmem>>, vector<8x16xf32>,
    return
  }
  func.func @transform_0(%arg0: i32, %arg1: i32) -> (i32, i32) {
    %c0_i32 = arith.constant 0 : i32
    %c0_i32_0 = arith.constant 0 : i32
    return %arg0, %c0_i32 : i32, i32
  }
  func.func @transform_1(%arg0: i32, %arg1: i32) -> (i32, i32, i32) {
    %c0_i32 = arith.constant 0 : i32
    %c0_i32_0 = arith.constant 0 : i32
    return %arg0, %arg1, %c0_i32 : i32, i32, i32
  }
  func.func @transform_2(%arg0: i32, %arg1: i32) -> (i32, i32) {
    %c0_i32 = arith.constant 0 : i32
    %c0_i32_0 = arith.constant 0 : i32
    return %arg1, %c0_i32 : i32, i32
  }
  func.func @transform_3(%arg0: i32, %arg1: i32) -> (i32, i32) {
    %c0_i32 = arith.constant 0 : i32
    %c0_i32_0 = arith.constant 0 : i32
    return %c0_i32, %arg1 : i32, i32
  }
  func.func @transform_4(%arg0: i32, %arg1: i32) -> (i32, i32) {
    %c0_i32 = arith.constant 0 : i32
    return %arg0, %arg1 : i32, i32
  }
}

</mosaic_0001>

<llo_original>
// kernel: tpu_custom_call.1
$region0: #{tpu_custom_call.1}
  #allocation0 [shape = 'u32[]', space=smem, size = 0x4, offset = 0x4, fixed_abs, tag = 'smem constant byte address 0x4 - core index']
  #allocation1 [shape = 'u32[144,128]{1,0:T(1,128)}', space=vmem, size = 0x12000, scoped, tag = 'internal scratch']
  %s0 = inlined_call_operand.hbm [shape: f32[16,32], index: 0, kind: input, shape index: {}]
  %s1 = inlined_call_operand.hbm [shape: f32[16,16,32], index: 1, kind: input, shape index: {}]
  %s2 = inlined_call_operand.hbm [shape: f32[16,32], index: 2, kind: input, shape index: {}]
  %s3 = inlined_call_operand.vmem [shape: f32[1,16], index: 3, kind: input, shape index: {}]
  %s4 = inlined_call_operand.hbm [shape: f32[16,16], index: 4, kind: output, shape index: {}]
  %s5 = sld [smem:[#allocation0]]
  $region61: #{tpu_custom_call.1} parent=0
    _
  %s7 = ssub.s32 1, %s5
  %s8 = scalar_select 0, %s7, %s5
  $region1: #{tpu_custom_call.1} parent=0
    #allocation2 [shape = 'u8[8192]{0}', space=vmem, size = 0x2000, scoped, tag = 'input window, operand 0']
    #allocation3 [shape = 's32[2]{0}', space=sflag, size = 0x8, scoped, tag = 'scoped memory for tpu_custom_call.1']
    #allocation4 [shape = 's32[2]{0}', space=sflag, size = 0x8, scoped, tag = 'scoped memory for tpu_custom_call.1']
    #allocation5 [shape = 'u8[131072]{0}', space=vmem, size = 0x20000, scoped, tag = 'input window, operand 1']
    #allocation6 [shape = 's32[2]{0}', space=sflag, size = 0x8, scoped, tag = 'scoped memory for tpu_custom_call.1']
    #allocation7 [shape = 'u8[8192]{0}', space=vmem, size = 0x2000, scoped, tag = 'input window, operand 2, single buffered']
    #allocation8 [shape = 'u8[8192]{0}', space=vmem, size = 0x2000, scoped, tag = 'output window, operand 0']
    %9 = vsyncpa [#allocation3], 0
    %s10 = scalar_lea.sflag [#allocation3], 1
    %11 = vsyncpa %s10, 0
    %12 = vsyncpa [#allocation6], 0
    %s13 = scalar_lea.sflag [#allocation6], 1
    %14 = vsyncpa %s13, 0
    %15 = vsyncpa [#allocation4], 0
    %s16 = scalar_lea.sflag [#allocation4], 1
    %17 = vsyncpa %s16, 0
    loop: start=0, step=1, limit=4
    $region2: #{tpu_custom_call.1} parent=1 // loop_pre_header
      _
    $region3: #{tpu_custom_call.1} parent=1 // loop_header
      %s19 = sphi 0, %s23
      %p20 = scmp.ge.s32.totalorder %s19, 4
      %s26 = sphi 0, %s38
      %s27 = sphi 0, %s34
      %s28 = sphi 0, %s26
      %s29 = sphi 0, %s27
      %s30 = sphi 0, %s28
      %s31 = sphi 0, %s29
      %s41 = sphi 0, %s43
      %s44 = sphi 0, %s41
      %s45 = sphi 0, %s44
      %s61 = sphi 0, %s45
      %s69 = sphi 0, %s71
      %s72 = sphi 0, %s69
      %s73 = sphi 0, %s72
      %s89 = sphi 0, %s73
      %s95 = sphi 0, %s97
      %s98 = sphi 0, %s95
      %s99 = sphi 0, %s98
      %s115 = sphi 0, %s99
      %s121 = sphi 0, %s123
      %s124 = sphi 0, %s121
      %s125 = sphi 0, %s124
      %s141 = sphi 0, %s125
      %s149 = sphi 0, %s151
      %s152 = sphi 0, %s149
      %s153 = sphi 0, %s152
      %s169 = sphi 0, %s153
    $region4: #{tpu_custom_call.1} parent=1 // loop_header_branch
      %22 = sbr.rel (%p20) target = $region8
    $region5: #{tpu_custom_call.1} parent=1 // loop_body
      %s24 = ssub.s32 %s19, 1
      %s25 = ssub.s32 %s19, 2
      %s32 = sadd.s32 1, %s27
      %p33 = scmp.ge.s32.totalorder %s32, 1
      %s34 = scalar_select %p33, 0, %s32
      %s35 = sadd.s32 1, %s26
      %s36 = scalar_select %p33, %s35, %s26
      %p37 = scmp.ge.s32.totalorder %s36, 2
      %s38 = scalar_select %p37, 0, %s36
      %s39 = ssub.s32 %s26, %s38
      %p40 = scmp.eq.s32.totalorder %s39, 0
      %s42 = sadd.s32 %s41, 1
      %s43 = scalar_select %p40, %s41, %s42
      %p46 = pneg %p40
      %p47 = scmp.eq.s32.totalorder %s19, 1
      %p48 = por %p46, %p47
      %p49 = scmp.ne.s32.totalorder %s41, %s44
      %p50 = scmp.eq.s32.totalorder %s19, 0
      %p51 = por %p49, %p50
      %p52 = scmp.ne.s32.totalorder %s41, %s44
      %p53 = scmp.eq.s32.totalorder %s24, 1
      %p54 = por %p52, %p53
      %p55 = scmp.ne.s32.totalorder %s44, %s45
      %p56 = scmp.eq.s32.totalorder %s24, 0
      %p57 = por %p55, %p56
      %p58 = scmp.ne.s32.totalorder %s44, %s45
      %p59 = scmp.eq.s32.totalorder %s25, 1
      %p60 = por %p58, %p59
      %p62 = scmp.ne.s32.totalorder %s45, %s61
      %p63 = scmp.eq.s32.totalorder %s25, 0
      %p64 = por %p62, %p63
      %s65 = ssub.s32 %s26, %s38
      %s66 = ssub.s32 %s27, %s34
      %s67 = sor.u32 %s65, %s66
      %p68 = scmp.eq.s32.totalorder %s67, 0
      %s70 = sadd.s32 %s69, 1
      %s71 = scalar_select %p68, %s69, %s70
      %p74 = pneg %p68
      %p75 = scmp.eq.s32.totalorder %s19, 1
      %p76 = por %p74, %p75
      %p77 = scmp.ne.s32.totalorder %s69, %s72
      %p78 = scmp.eq.s32.totalorder %s19, 0
      %p79 = por %p77, %p78
      %p80 = scmp.ne.s32.totalorder %s69, %s72
      %p81 = scmp.eq.s32.totalorder %s24, 1
      %p82 = por %p80, %p81
      %p83 = scmp.ne.s32.totalorder %s72, %s73
      %p84 = scmp.eq.s32.totalorder %s24, 0
      %p85 = por %p83, %p84
      %p86 = scmp.ne.s32.totalorder %s72, %s73
      %p87 = scmp.eq.s32.totalorder %s25, 1
      %p88 = por %p86, %p87
      %p90 = scmp.ne.s32.totalorder %s73, %s89
      %p91 = scmp.eq.s32.totalorder %s25, 0
      %p92 = por %p90, %p91
      %s93 = ssub.s32 %s27, %s34
      %p94 = scmp.eq.s32.totalorder %s93, 0
      %s96 = sadd.s32 %s95, 1
      %s97 = scalar_select %p94, %s95, %s96
      %p100 = pneg %p94
      %p101 = scmp.eq.s32.totalorder %s19, 1
      %p102 = por %p100, %p101
      %p103 = scmp.ne.s32.totalorder %s95, %s98
      %p104 = scmp.eq.s32.totalorder %s19, 0
      %p105 = por %p103, %p104
      %p106 = scmp.ne.s32.totalorder %s95, %s98
      %p107 = scmp.eq.s32.totalorder %s24, 1
      %p108 = por %p106, %p107
      %p109 = scmp.ne.s32.totalorder %s98, %s99
      %p110 = scmp.eq.s32.totalorder %s24, 0
      %p111 = por %p109, %p110
      %p112 = scmp.ne.s32.totalorder %s98, %s99
      %p113 = scmp.eq.s32.totalorder %s25, 1
      %p114 = por %p112, %p113
      %p116 = scmp.ne.s32.totalorder %s99, %s115
      %p117 = scmp.eq.s32.totalorder %s25, 0
      %p118 = por %p116, %p117
      %s119 = ssub.s32 %s27, %s34
      %p120 = scmp.eq.s32.totalorder %s119, 0
      %s122 = sadd.s32 %s121, 1
      %s123 = scalar_select %p120, %s121, %s122
      %p126 = pneg %p120
      %p127 = scmp.eq.s32.totalorder %s19, 1
      %p128 = por %p126, %p127
      %p129 = scmp.ne.s32.totalorder %s121, %s124
      %p130 = scmp.eq.s32.totalorder %s19, 0
      %p131 = por %p129, %p130
      %p132 = scmp.ne.s32.totalorder %s121, %s124
      %p133 = scmp.eq.s32.totalorder %s24, 1
      %p134 = por %p132, %p133
      %p135 = scmp.ne.s32.totalorder %s124, %s125
      %p136 = scmp.eq.s32.totalorder %s24, 0
      %p137 = por %p135, %p136
      %p138 = scmp.ne.s32.totalorder %s124, %s125
      %p139 = scmp.eq.s32.totalorder %s25, 1
      %p140 = por %p138, %p139
      %p142 = scmp.ne.s32.totalorder %s125, %s141
      %p143 = scmp.eq.s32.totalorder %s25, 0
      %p144 = por %p142, %p143
      %s145 = ssub.s32 %s26, %s38
      %s146 = ssub.s32 %s27, %s34
      %s147 = sor.u32 %s145, %s146
      %p148 = scmp.eq.s32.totalorder %s147, 0
      %s150 = sadd.s32 %s149, 1
      %s151 = scalar_select %p148, %s149, %s150
      %p154 = pneg %p148
      %p155 = scmp.eq.s32.totalorder %s19, 1
      %p156 = por %p154, %p155
      %p157 = scmp.ne.s32.totalorder %s149, %s152
      %p158 = scmp.eq.s32.totalorder %s19, 0
      %p159 = por %p157, %p158
      %p160 = scmp.ne.s32.totalorder %s149, %s152
      %p161 = scmp.eq.s32.totalorder %s24, 1
      %p162 = por %p160, %p161
      %p163 = scmp.ne.s32.totalorder %s152, %s153
      %p164 = scmp.eq.s32.totalorder %s24, 0
      %p165 = por %p163, %p164
      %p166 = scmp.ne.s32.totalorder %s152, %s153
      %p167 = scmp.eq.s32.totalorder %s25, 1
      %p168 = por %p166, %p167
      %p170 = scmp.ne.s32.totalorder %s153, %s169
      %p171 = scmp.eq.s32.totalorder %s25, 0
      %p172 = por %p170, %p171
      %p173 = scmp.le.s32.totalorder 1, %s19
      %p174 = scmp.lt.s32.totalorder %s19, 3
      %p175 = pnand %p173, %p174
      %p176 = pneg %p175
      // Predicated region
      $region9: #{tpu_custom_call.1} parent=5 // pred_check
        _
      $region10: #{tpu_custom_call.1} parent=5 // pred_check_branch
        %178 = sbr.rel (%p175) target = $region12
      $region11: #{tpu_custom_call.1} parent=5 // pred_region
        %s179 = ssub.s32 %s19, 1
        // Predicated region
        $region13: #{tpu_custom_call.1} parent=11 // pred_check
          %p180 = pneg %p111
        $region14: #{tpu_custom_call.1} parent=11 // pred_check_branch
          %182 = sbr.rel (%p180) target = $region16
        $region15: #{tpu_custom_call.1} parent=11 // pred_region
          %s183 = smul.u32 2, %s29
          %s185 = ssub.s32 256, 256
          %186 = vsyncadd [#allocation6], %s185
          %s187 = smul.addr %s183, 128
          %s188 = scalar_lea.hbm %s2, %s187
          %s189 = sshll.u32 [#allocation7], 4
          %s190 = int_to_ptr.vmem [resolvable:$true] %s189
          %195 = dma.hbm_to_vmem [thread:$0]  %s188, 256, %s190, [#allocation6], 128, 128, 8
        $region16: #{tpu_custom_call.1} parent=11 // pred_fallthru
          _
        // Predicated region
        $region17: #{tpu_custom_call.1} parent=11 // pred_check
          %p196 = pneg %p137
        $region18: #{tpu_custom_call.1} parent=11 // pred_check_branch
          %198 = sbr.rel (%p196) target = $region20
        $region19: #{tpu_custom_call.1} parent=11 // pred_region
          %p199 = scmp.lt.s32.totalorder %s29, 0
          %s200 = scalar_select %p199, %s29, 0
          %s201 = scalar_lea.vmem %s3, %s200
        $region20: #{tpu_custom_call.1} parent=11 // pred_fallthru
          _
      $region12: #{tpu_custom_call.1} parent=5 // pred_fallthru
        _
      %p202 = scmp.lt.s32.totalorder %s19, 2
      // Predicated region
      $region21: #{tpu_custom_call.1} parent=5 // pred_check
        %p203 = pneg %p202
      $region22: #{tpu_custom_call.1} parent=5 // pred_check_branch
        %205 = sbr.rel (%p203) target = $region24
      $region23: #{tpu_custom_call.1} parent=5 // pred_region
        // Predicated region
        $region25: #{tpu_custom_call.1} parent=23 // pred_check
          %p206 = pneg %p51
        $region26: #{tpu_custom_call.1} parent=23 // pred_check_branch
          %208 = sbr.rel (%p206) target = $region28
        $region27: #{tpu_custom_call.1} parent=23 // pred_region
          %s209 = sand.u32 %s41, 1
          %s210 = scalar_lea.sflag [#allocation3], %s209
          %s211 = sand.u32 %s41, 1
          %s212 = smul.addr %s211, 8
          %s213 = scalar_lea.vmem [#allocation2], %s212
          %s215 = ssub.s32 128, 128
          %216 = vsyncadd %s210, %s215
          %s217 = smul.addr %s26, 128
          %s218 = scalar_lea.hbm %s0, %s217
          %s220 = sshll.u32 %s213, 4
          %s221 = int_to_ptr.vmem [resolvable:$true] %s220
          %223 = dma.hbm_to_vmem [thread:$0]  %s218, 128, %s221, %s210
        $region28: #{tpu_custom_call.1} parent=23 // pred_fallthru
          _
        // Predicated region
        $region29: #{tpu_custom_call.1} parent=23 // pred_check
          %p224 = pneg %p79
        $region30: #{tpu_custom_call.1} parent=23 // pred_check_branch
          %226 = sbr.rel (%p224) target = $region32
        $region31: #{tpu_custom_call.1} parent=23 // pred_region
          %s227 = sand.u32 %s19, 1
          %s228 = scalar_lea.sflag [#allocation6], %s227
          %s229 = sand.u32 %s69, 1
          %s230 = smul.addr %s229, 128
          %s231 = scalar_lea.vmem [#allocation5], %s230
          %s232 = smul.u32 8, %s26
          %s233 = smul.u32 2, %s27
          %s235 = ssub.s32 2048, 2048
          %236 = vsyncadd %s228, %s235
          %s237 = smul.addr %s232, 2
          %s238 = sadd.s32 %s233, %s237
          %s239 = smul.addr %s238, 128
          %s240 = scalar_lea.hbm %s1, %s239
          %s241 = sshll.u32 %s231, 4
          %s242 = int_to_ptr.vmem [resolvable:$true] %s241
          %247 = dma.hbm_to_vmem [thread:$0]  %s240, 2048, %s242, %s228, 128, 128, 8
        $region32: #{tpu_custom_call.1} parent=23 // pred_fallthru
          _
      $region24: #{tpu_custom_call.1} parent=5 // pred_fallthru
        _
      %p248 = scmp.le.s32.totalorder 1, %s19
      %p249 = scmp.lt.s32.totalorder %s19, 3
      %p250 = pnand %p248, %p249
      %p251 = pneg %p250
      // Predicated region
      $region33: #{tpu_custom_call.1} parent=5 // pred_check
        _
      $region34: #{tpu_custom_call.1} parent=5 // pred_check_branch
        %253 = sbr.rel (%p250) target = $region36
      $region35: #{tpu_custom_call.1} parent=5 // pred_region
        %s254 = ssub.s32 %s19, 1
        %s255 = sand.u32 %s44, 1
        %s256 = scalar_lea.sflag [#allocation3], %s255
        %s257 = sand.u32 %s44, 1
        %s258 = smul.addr %s257, 8
        %s259 = scalar_lea.vmem [#allocation2], %s258
        // Predicated region
        $region37: #{tpu_custom_call.1} parent=35 // pred_check
          %p260 = pneg %p57
        $region38: #{tpu_custom_call.1} parent=35 // pred_check_branch
          %262 = sbr.rel (%p260) target = $region40
        $region39: #{tpu_custom_call.1} parent=35 // pred_region
          %263 = dma.done %s256, 128
        $region40: #{tpu_custom_call.1} parent=35 // pred_fallthru
          _
        %s264 = sand.u32 %s24, 1
        %s265 = scalar_lea.sflag [#allocation6], %s264
        %s266 = sand.u32 %s72, 1
        %s267 = smul.addr %s266, 128
        %s268 = scalar_lea.vmem [#allocation5], %s267
        // Predicated region
        $region41: #{tpu_custom_call.1} parent=35 // pred_check
          %p269 = pneg %p85
        $region42: #{tpu_custom_call.1} parent=35 // pred_check_branch
          %271 = sbr.rel (%p269) target = $region44
        $region43: #{tpu_custom_call.1} parent=35 // pred_region
          %272 = dma.done %s265, 2048
        $region44: #{tpu_custom_call.1} parent=35 // pred_fallthru
          _
        // Predicated region
        $region45: #{tpu_custom_call.1} parent=35 // pred_check
          %p273 = pneg %p111
        $region46: #{tpu_custom_call.1} parent=35 // pred_check_branch
          %275 = sbr.rel (%p273) target = $region48
        $region47: #{tpu_custom_call.1} parent=35 // pred_region
          %276 = dma.done [#allocation6], 256
        $region48: #{tpu_custom_call.1} parent=35 // pred_fallthru
          _
        %s277 = sand.u32 %s44, 1
        %s278 = scalar_lea.sflag [#allocation3], %s277
        %s279 = sand.u32 %s44, 1
        %s280 = smul.addr %s279, 8
        %s281 = scalar_lea.vmem [#allocation2], %s280
        %p282 = pneg %p57
        %p283 = pneg %p54
        %s284 = sand.u32 %s24, 1
        %s285 = scalar_lea.sflag [#allocation6], %s284
        %s286 = sand.u32 %s72, 1
        %s287 = smul.addr %s286, 128
        %s288 = scalar_lea.vmem [#allocation5], %s287
        %p289 = pneg %p85
        %p290 = pneg %p82
        %p291 = pneg %p111
        %p292 = pneg %p108
        %p293 = scmp.lt.s32.totalorder %s29, 0
        %s294 = scalar_select %p293, %s29, 0
        %s295 = scalar_lea.vmem %s3, %s294
        %p296 = pneg %p137
        %p297 = pneg %p134
        %p298 = pneg %p165
        %p299 = pneg %p162
        %s300 = sand.u32 %s152, 1
        %s301 = scalar_lea.sflag [#allocation4], %s300
        %s302 = sand.u32 %s152, 1
        %s303 = smul.addr %s302, 8
        %s304 = scalar_lea.vmem [#allocation8], %s303
        %s305 = smul.u32 8, %s28
        %s306 = smul.u32 2, %s29
        %s307 = smul.u32 2, %s29
        %p308 = scmp.lt.s32.totalorder %s29, 0
        %s309 = scalar_select %p308, %s29, 0
        %s310 = scalar_lea.vmem %s3, %s309
        %v311 = vld [vmem:[%s268] sm:$0xff]
        %v312 = vld [vmem:[%s268 + $0x8] sm:$0xff]
        %v313 = vld [vmem:[%s268 + $0x10] sm:$0xff]
        %v314 = vld [vmem:[%s268 + $0x18] sm:$0xff]
        %v315 = vld [vmem:[%s268 + $0x20] sm:$0xff]
        %v316 = vld [vmem:[%s268 + $0x28] sm:$0xff]
        %v317 = vld [vmem:[%s268 + $0x30] sm:$0xff]
        %v318 = vld [vmem:[%s268 + $0x38] sm:$0xff]
        %v319 = vld [vmem:[%s268 + $0x40] sm:$0xff]
        %v320 = vld [vmem:[%s268 + $0x48] sm:$0xff]
        %v321 = vld [vmem:[%s268 + $0x50] sm:$0xff]
        %v322 = vld [vmem:[%s268 + $0x58] sm:$0xff]
        %v323 = vld [vmem:[%s268 + $0x60] sm:$0xff]
        %v324 = vld [vmem:[%s268 + $0x68] sm:$0xff]
        %v325 = vld [vmem:[%s268 + $0x70] sm:$0xff]
        %v326 = vld [vmem:[%s268 + $0x78] sm:$0xff]
        %v327 = vld [vmem:[#allocation7] sm:$0xff]
        %v328 = vld [vmem:[#allocation7 + $0x8] sm:$0xff]
        %v329 = vmul.f32 %v311, %v327
        %v330 = vmul.f32 %v312, %v328
        %v331 = vmul.f32 %v313, %v327
        %v332 = vmul.f32 %v314, %v328
        %v333 = vmul.f32 %v315, %v327
        %v334 = vmul.f32 %v316, %v328
        %v335 = vmul.f32 %v317, %v327
        %v336 = vmul.f32 %v318, %v328
        %v337 = vmul.f32 %v319, %v327
        %v338 = vmul.f32 %v320, %v328
        %v339 = vmul.f32 %v321, %v327
        %v340 = vmul.f32 %v322, %v328
        %v341 = vmul.f32 %v323, %v327
        %v342 = vmul.f32 %v324, %v328
        %v343 = vmul.f32 %v325, %v327
        %v344 = vmul.f32 %v326, %v328
        %v345 = vld [vmem:[%s259] sm:$0xff]
        %v347 = vcombine.high %v345, %v345
        %v349 = vunpack.c.l.s4 1966171168
        %v350 = vunpack.c.0.s8 %v349
        %v351 = vlaneseq
        %v352 = vshrl.u32 %v351, 7
        %v353 = vsub.s32 %v350, %v352
        %v354 = vrot.slane %v345, %v353
        %v356 = vunpack.c.l.s4 1966171168
        %v357 = vunpack.c.0.s8 %v356
        %v358 = vlaneseq
        %v359 = vshrl.u32 %v358, 7
        %v360 = vsub.s32 %v357, %v359
        %v361 = vrot.slane %v347, %v360
        %v362 = vcombine.high %v354, %v354
        %v363 = vcombine.high %v361, %v361
        %v365 = vunpack.c.l.s4 1966171168
        %v366 = vunpack.c.0.s8 %v365
        %v367 = vlaneseq
        %v368 = vshrl.u32 %v367, 7
        %v369 = vsub.s32 %v366, %v368
        %v370 = vrot.slane %v354, %v369
        %v372 = vunpack.c.l.s4 1966171168
        %v373 = vunpack.c.0.s8 %v372
        %v374 = vlaneseq
        %v375 = vshrl.u32 %v374, 7
        %v376 = vsub.s32 %v373, %v375
        %v377 = vrot.slane %v361, %v376
        %v379 = vunpack.c.l.s4 1966171168
        %v380 = vunpack.c.0.s8 %v379
        %v381 = vlaneseq
        %v382 = vshrl.u32 %v381, 7
        %v383 = vsub.s32 %v380, %v382
        %v384 = vrot.slane %v362, %v383
        %v386 = vunpack.c.l.s4 1966171168
        %v387 = vunpack.c.0.s8 %v386
        %v388 = vlaneseq
        %v389 = vshrl.u32 %v388, 7
        %v390 = vsub.s32 %v387, %v389
        %v391 = vrot.slane %v363, %v390
        %v392 = vcombine.high %v370, %v370
        %v393 = vcombine.high %v377, %v377
        %v394 = vcombine.high %v384, %v384
        %v395 = vcombine.high %v391, %v391
        %v396 = vlaneseq
        %v397 = vshrl.u32 %v396, 7
        %v398 = vsub.s32 0, %v397
        %v399 = vrot.slane %v370, %v398
        %v400 = vlaneseq
        %v401 = vshrl.u32 %v400, 7
        %v402 = vsub.s32 0, %v401
        %v403 = vrot.slane %v384, %v402
        %v404 = vlaneseq
        %v405 = vshrl.u32 %v404, 7
        %v406 = vsub.s32 0, %v405
        %v407 = vrot.slane %v392, %v406
        %v408 = vlaneseq
        %v409 = vshrl.u32 %v408, 7
        %v410 = vsub.s32 0, %v409
        %v411 = vrot.slane %v394, %v410
        %v412 = vlaneseq
        %v413 = vshrl.u32 %v412, 7
        %v414 = vsub.s32 0, %v413
        %v415 = vrot.slane %v377, %v414
        %v416 = vlaneseq
        %v417 = vshrl.u32 %v416, 7
        %v418 = vsub.s32 0, %v417
        %v419 = vrot.slane %v391, %v418
        %v420 = vlaneseq
        %v421 = vshrl.u32 %v420, 7
        %v422 = vsub.s32 0, %v421
        %v423 = vrot.slane %v393, %v422
        %v424 = vlaneseq
        %v425 = vshrl.u32 %v424, 7
        %v426 = vsub.s32 0, %v425
        %v427 = vrot.slane %v395, %v426
        %v436 = vmul.f32 %v329, %v399
        %v437 = vmul.f32 %v330, %v399
        %v438 = vmul.f32 %v331, %v403
        %v439 = vmul.f32 %v332, %v403
        %v440 = vmul.f32 %v333, %v407
        %v441 = vmul.f32 %v334, %v407
        %v442 = vmul.f32 %v335, %v411
        %v443 = vmul.f32 %v336, %v411
        %v444 = vmul.f32 %v337, %v415
        %v445 = vmul.f32 %v338, %v415
        %v446 = vmul.f32 %v339, %v419
        %v447 = vmul.f32 %v340, %v419
        %v448 = vmul.f32 %v341, %v423
        %v449 = vmul.f32 %v342, %v423
        %v450 = vmul.f32 %v343, %v427
        %v451 = vmul.f32 %v344, %v427
        %vm452 = vcmask 261120
        %v453 = vsel %vm452, %v436, 0.0
        %454 = vadd.xlane.f32.xlu0 %v453
        %v455 = vpop.xlane.xlu0 %454
        %v456 = vsel %vm452, %v437, 0.0
        %457 = vadd.xlane.f32.xlu0 %v456
        %v458 = vpop.xlane.xlu0 %457
        %v459 = vsel %vm452, %v438, 0.0
        %460 = vadd.xlane.f32.xlu0 %v459
        %v461 = vpop.xlane.xlu0 %460
        %v462 = vsel %vm452, %v439, 0.0
        %463 = vadd.xlane.f32.xlu0 %v462
        %v464 = vpop.xlane.xlu0 %463
        %v465 = vsel %vm452, %v440, 0.0
        %466 = vadd.xlane.f32.xlu0 %v465
        %v467 = vpop.xlane.xlu0 %466
        %v468 = vsel %vm452, %v441, 0.0
        %469 = vadd.xlane.f32.xlu0 %v468
        %v470 = vpop.xlane.xlu0 %469
        %v471 = vsel %vm452, %v442, 0.0
        %472 = vadd.xlane.f32.xlu0 %v471
        %v473 = vpop.xlane.xlu0 %472
        %v474 = vsel %vm452, %v443, 0.0
        %475 = vadd.xlane.f32.xlu0 %v474
        %v476 = vpop.xlane.xlu0 %475
        %v477 = vsel %vm452, %v444, 0.0
        %478 = vadd.xlane.f32.xlu0 %v477
        %v479 = vpop.xlane.xlu0 %478
        %v480 = vsel %vm452, %v445, 0.0
        %481 = vadd.xlane.f32.xlu0 %v480
        %v482 = vpop.xlane.xlu0 %481
        %v483 = vsel %vm452, %v446, 0.0
        %484 = vadd.xlane.f32.xlu0 %v483
        %v485 = vpop.xlane.xlu0 %484
        %v486 = vsel %vm452, %v447, 0.0
        %487 = vadd.xlane.f32.xlu0 %v486
        %v488 = vpop.xlane.xlu0 %487
        %v489 = vsel %vm452, %v448, 0.0
        %490 = vadd.xlane.f32.xlu0 %v489
        %v491 = vpop.xlane.xlu0 %490
        %v492 = vsel %vm452, %v449, 0.0
        %493 = vadd.xlane.f32.xlu0 %v492
        %v494 = vpop.xlane.xlu0 %493
        %v495 = vsel %vm452, %v450, 0.0
        %496 = vadd.xlane.f32.xlu0 %v495
        %v497 = vpop.xlane.xlu0 %496
        %v498 = vsel %vm452, %v451, 0.0
        %499 = vadd.xlane.f32.xlu0 %v498
        %v500 = vpop.xlane.xlu0 %499
        %v501 = vld [vmem:[%s310] sm:$0x1]
        %v503 = vlaneseq
        %v504 = vshrl.u32 %v503, 7
        %v505 = vsub.s32 0, %v504
        %v506 = vrot.slane %v501, %v505
        %508 = vbcast.lane.b32.xlu0 %v506, 256
        %v509 = vpop.permute.xlu0 %508
        %s511 = sor.u32 256, 8
        %512 = vbcast.lane.b32.xlu0 %v506, %s511
        %v513 = vpop.permute.xlu0 %512
        %v516 = vadd.f32 %v455, %v509
        %v517 = vadd.f32 %v458, %v513
        %v518 = vadd.f32 %v461, %v509
        %v519 = vadd.f32 %v464, %v513
        %v520 = vadd.f32 %v467, %v509
        %v521 = vadd.f32 %v470, %v513
        %v522 = vadd.f32 %v473, %v509
        %v523 = vadd.f32 %v476, %v513
        %v524 = vadd.f32 %v479, %v509
        %v525 = vadd.f32 %v482, %v513
        %v526 = vadd.f32 %v485, %v509
        %v527 = vadd.f32 %v488, %v513
        %v528 = vadd.f32 %v491, %v509
        %v529 = vadd.f32 %v494, %v513
        %v530 = vadd.f32 %v497, %v509
        %v531 = vadd.f32 %v500, %v513
        %548 = vset.pattern.permute.xlu0 0
        %549 = vperm.xlu0 %548, %v516
        %v550 = vpop.permute.xlu0 %549
        %551 = vset.pattern.permute.xlu0 0
        %552 = vperm.xlu0 %551, %v517
        %v553 = vpop.permute.xlu0 %552
        %554 = vset.pattern.permute.xlu0 0
        %555 = vperm.xlu0 %554, %v518
        %v556 = vpop.permute.xlu0 %555
        %557 = vset.pattern.permute.xlu0 0
        %558 = vperm.xlu0 %557, %v519
        %v559 = vpop.permute.xlu0 %558
        %560 = vset.pattern.permute.xlu0 0
        %561 = vperm.xlu0 %560, %v520
        %v562 = vpop.permute.xlu0 %561
        %563 = vset.pattern.permute.xlu0 0
        %564 = vperm.xlu0 %563, %v521
        %v565 = vpop.permute.xlu0 %564
        %566 = vset.pattern.permute.xlu0 0
        %567 = vperm.xlu0 %566, %v522
        %v568 = vpop.permute.xlu0 %567
        %569 = vset.pattern.permute.xlu0 0
        %570 = vperm.xlu0 %569, %v523
        %v571 = vpop.permute.xlu0 %570
        %572 = vset.pattern.permute.xlu0 0
        %573 = vperm.xlu0 %572, %v524
        %v574 = vpop.permute.xlu0 %573
        %575 = vset.pattern.permute.xlu0 0
        %576 = vperm.xlu0 %575, %v525
        %v577 = vpop.permute.xlu0 %576
        %578 = vset.pattern.permute.xlu0 0
        %579 = vperm.xlu0 %578, %v526
        %v580 = vpop.permute.xlu0 %579
        %581 = vset.pattern.permute.xlu0 0
        %582 = vperm.xlu0 %581, %v527
        %v583 = vpop.permute.xlu0 %582
        %584 = vset.pattern.permute.xlu0 0
        %585 = vperm.xlu0 %584, %v528
        %v586 = vpop.permute.xlu0 %585
        %587 = vset.pattern.permute.xlu0 0
        %588 = vperm.xlu0 %587, %v529
        %v589 = vpop.permute.xlu0 %588
        %590 = vset.pattern.permute.xlu0 0
        %591 = vperm.xlu0 %590, %v530
        %v592 = vpop.permute.xlu0 %591
        %593 = vset.pattern.permute.xlu0 0
        %594 = vperm.xlu0 %593, %v531
        %v595 = vpop.permute.xlu0 %594
        %v596 = vlaneseq
        %v597 = vand.u32 %v596, 127
        %v598 = vlaneseq
        %v599 = vshrl.u32 %v598, 7
        %v600 = vsub.s32 %v597, %v599
        %v601 = vrot.slane %v550, %v600
        %v602 = vadd.s32 %v597, 4294967288
        %v603 = vlaneseq
        %v604 = vshrl.u32 %v603, 7
        %v605 = vsub.s32 %v602, %v604
        %v606 = vrot.slane %v553, %v605
        %vm607 = vcmask 130112
        %v608 = vsel %vm607, %v606, %v601
        %v609 = vlaneseq
        %v610 = vshrl.u32 %v609, 7
        %v611 = vsub.s32 %v597, %v610
        %v612 = vrot.slane %v556, %v611
        %v613 = vlaneseq
        %v614 = vshrl.u32 %v613, 7
        %v615 = vsub.s32 %v602, %v614
        %v616 = vrot.slane %v559, %v615
        %v617 = vsel %vm607, %v616, %v612
        %v618 = vlaneseq
        %v619 = vshrl.u32 %v618, 7
        %v620 = vsub.s32 %v597, %v619
        %v621 = vrot.slane %v562, %v620
        %v622 = vlaneseq
        %v623 = vshrl.u32 %v622, 7
        %v624 = vsub.s32 %v602, %v623
        %v625 = vrot.slane %v565, %v624
        %v626 = vsel %vm607, %v625, %v621
        %v627 = vlaneseq
        %v628 = vshrl.u32 %v627, 7
        %v629 = vsub.s32 %v597, %v628
        %v630 = vrot.slane %v568, %v629
        %v631 = vlaneseq
        %v632 = vshrl.u32 %v631, 7
        %v633 = vsub.s32 %v602, %v632
        %v634 = vrot.slane %v571, %v633
        %v635 = vsel %vm607, %v634, %v630
        %v636 = vlaneseq
        %v637 = vshrl.u32 %v636, 7
        %v638 = vsub.s32 %v597, %v637
        %v639 = vrot.slane %v574, %v638
        %v640 = vlaneseq
        %v641 = vshrl.u32 %v640, 7
        %v642 = vsub.s32 %v602, %v641
        %v643 = vrot.slane %v577, %v642
        %v644 = vsel %vm607, %v643, %v639
        %v645 = vlaneseq
        %v646 = vshrl.u32 %v645, 7
        %v647 = vsub.s32 %v597, %v646
        %v648 = vrot.slane %v580, %v647
        %v649 = vlaneseq
        %v650 = vshrl.u32 %v649, 7
        %v651 = vsub.s32 %v602, %v650
        %v652 = vrot.slane %v583, %v651
        %v653 = vsel %vm607, %v652, %v648
        %v654 = vlaneseq
        %v655 = vshrl.u32 %v654, 7
        %v656 = vsub.s32 %v597, %v655
        %v657 = vrot.slane %v586, %v656
        %v658 = vlaneseq
        %v659 = vshrl.u32 %v658, 7
        %v660 = vsub.s32 %v602, %v659
        %v661 = vrot.slane %v589, %v660
        %v662 = vsel %vm607, %v661, %v657
        %v663 = vlaneseq
        %v664 = vshrl.u32 %v663, 7
        %v665 = vsub.s32 %v597, %v664
        %v666 = vrot.slane %v592, %v665
        %v667 = vlaneseq
        %v668 = vshrl.u32 %v667, 7
        %v669 = vsub.s32 %v602, %v668
        %v670 = vrot.slane %v595, %v669
        %v671 = vsel %vm607, %v670, %v666
        %vm672 = vcmask 1041409
        %v673 = vsel %vm672, %v617, %v608
        %vm674 = vcmask 1042434
        %v675 = vsel %vm674, %v626, %v673
        %vm676 = vcmask 1043459
        %v677 = vsel %vm676, %v635, %v675
        %vm678 = vcmask 1044484
        %v679 = vsel %vm678, %v644, %v677
        %vm680 = vcmask 1045509
        %v681 = vsel %vm680, %v653, %v679
        %vm682 = vcmask 1046534
        %v683 = vsel %vm682, %v662, %v681
        %vm684 = vcmask 1047559
        %v685 = vsel %vm684, %v671, %v683
        %vm687 = vcmask 130048
        %688 = vst.msk [vmem:[%s304] sm:$0xff] %vm687, %v685
        %s689 = sand.u32 %s152, 1
        %s690 = scalar_lea.sflag [#allocation4], %s689
        %s691 = sand.u32 %s152, 1
        %s692 = smul.addr %s691, 8
        %s693 = scalar_lea.vmem [#allocation8], %s692
        // Predicated region
        $region49: #{tpu_custom_call.1} parent=35 // pred_check
          %p694 = pneg %p162
        $region50: #{tpu_custom_call.1} parent=35 // pred_check_branch
          %696 = sbr.rel (%p694) target = $region52
        $region51: #{tpu_custom_call.1} parent=35 // pred_region
          %s698 = ssub.s32 128, 128
          %699 = vsyncadd %s690, %s698
          %s700 = sadd.s32 %s29, %s28
          %s701 = smul.addr %s700, 128
          %s702 = scalar_lea.hbm %s4, %s701
          %s704 = sshll.u32 %s693, 4
          %s705 = int_to_ptr.vmem [resolvable:$true] %s704
          %707 = dma.vmem_to_hbm [thread:$0]  %s705, 128, %s702, %s690
        $region52: #{tpu_custom_call.1} parent=35 // pred_fallthru
          _
      $region36: #{tpu_custom_call.1} parent=5 // pred_fallthru
        _
      %p708 = scmp.le.s32.totalorder 2, %s19
      // Predicated region
      $region53: #{tpu_custom_call.1} parent=5 // pred_check
        %p709 = pneg %p708
      $region54: #{tpu_custom_call.1} parent=5 // pred_check_branch
        %711 = sbr.rel (%p709) target = $region56
      $region55: #{tpu_custom_call.1} parent=5 // pred_region
        %s712 = ssub.s32 %s19, 2
        // Predicated region
        $region57: #{tpu_custom_call.1} parent=55 // pred_check
          %p713 = pneg %p168
        $region58: #{tpu_custom_call.1} parent=55 // pred_check_branch
          %715 = sbr.rel (%p713) target = $region60
        $region59: #{tpu_custom_call.1} parent=55 // pred_region
          %s716 = sand.u32 %s153, 1
          %s717 = scalar_lea.sflag [#allocation4], %s716
          %s718 = sand.u32 %s153, 1
          %s719 = smul.addr %s718, 8
          %s720 = scalar_lea.vmem [#allocation8], %s719
          %721 = dma.done %s717, 128
        $region60: #{tpu_custom_call.1} parent=55 // pred_fallthru
          _
      $region56: #{tpu_custom_call.1} parent=5 // pred_fallthru
        _
    $region6: #{tpu_custom_call.1} parent=1 // loop_footer
      %s23 = sadd.s32 1, %s19
    $region7: #{tpu_custom_call.1} parent=1 // loop_footer_branch
      %18 = sbr.rel target = $region3
    $region8: #{tpu_custom_call.1} parent=1 // loop_exit
      _
    %722 = vsyncpa [#allocation3], 1
    %s723 = scalar_lea.sflag [#allocation3], 1
    %724 = vsyncpa %s723, 1
    %725 = vsyncpa [#allocation6], 1
    %s726 = scalar_lea.sflag [#allocation6], 1
    %727 = vsyncpa %s726, 1
    %728 = vsyncpa [#allocation4], 1
    %s729 = scalar_lea.sflag [#allocation4], 1
    %730 = vsyncpa %s729, 1

</llo_original>
